<compile_context>
chip_gen: v6e
topology: v6e:2x2x1
jax: 0.10.0
libtpu: 0.0.40
codegen_flags: <defaults>
</compile_context>

<pallas_src>
from functools import lru_cache, partial

import numpy as np
import jax
import jax.numpy as jnp
from jax import lax
from jax.experimental import pallas as pl
from jax.experimental.pallas import tpu as pltpu


def attention_kernel(x_ref, wq_ref, wk_ref, wv_ref, wproj_ref, bproj_ref,
                     rep_ref, unrep_ref, hmask_ref, *rest, cross_batch_mask):
    # x_ref:     (R, C)  bf16   R = block_b * N rows, ordered (batch, token)
    # wq/wk/wv:  (C, D)  bf16   D = in_dim; attention scale pre-folded into Wq
    # wproj_ref: (D, D)  bf16
    # bproj_ref: (1, D)  f32
    # rep_ref:   (F, R)  bf16   F = block_b * H * N; rep[(b,h,n),(b',n')] = [b==b' and n==n']
    # unrep_ref: (R, F)  bf16   rep^T (host-side, avoids an in-kernel transpose)
    # hmask_ref: (F, D)  bf16   hmask[(b,h,n), d] = [d // head_dim == h]
    # negmask:   (F, R)  f32    0 where same batch, -1e30 otherwise (only if block_b > 1)
    # o_ref:     (R, D)
    if cross_batch_mask:
        negmask_ref, o_ref = rest
    else:
        (o_ref,) = rest

    x = x_ref[...]                                                     # (R, C) bf16

    # Per-section projections; f32 accumulation on the MXU.
    q2 = jnp.dot(x, wq_ref[...], preferred_element_type=jnp.float32)  # (R, D)
    k2 = jnp.dot(x, wk_ref[...], preferred_element_type=jnp.float32)  # (R, D)
    v2 = jnp.dot(x, wv_ref[...], preferred_element_type=jnp.float32)  # (R, D)
    k2b = k2.astype(jnp.bfloat16)
    v2b = v2.astype(jnp.bfloat16)

    rep = rep_ref[...]
    hmask = hmask_ref[...]

    # Replicate q rows along the fused (batch, head, query) axis via one MXU matmul
    # (rep is 0/1, so the f32 -> bf16 cast below is lossless), then mask each fused
    # row to its own head's feature span.
    qexp = (jnp.dot(rep, q2.astype(jnp.bfloat16),
                    preferred_element_type=jnp.float32)
            .astype(jnp.bfloat16) * hmask)                             # (F, D) bf16

    # All heads' logits in one matmul: row = (batch, head, query), col = key token.
    s = lax.dot_general(qexp, k2b, (((1,), (1,)), ((), ())),
                        preferred_element_type=jnp.float32)            # (F, R) f32
    if cross_batch_mask:
        s = s + negmask_ref[...]          # -1e30 on cross-batch (row, key) pairs

    # Each row is exactly one softmax segment -> exact per-(query, head) max.
    m = jnp.max(s, axis=-1, keepdims=True)
    p = jnp.exp(s - m)                    # masked entries underflow to exactly 0
    denom = jnp.sum(p, axis=-1, keepdims=True)       # >= 1 (max entry contributes 1)
    p = p * pl.reciprocal(denom, approx=True)        # EUP slot, ~free after the exp

    # attn @ V for every head at once; zero features outside each row's head, then
    # collapse the head axis back to concat-head layout with one more MXU matmul.
    y = jnp.dot(p.astype(jnp.bfloat16), v2b,
                preferred_element_type=jnp.float32)                    # (F, D)
    y = y.astype(jnp.bfloat16) * hmask
    y = jnp.dot(unrep_ref[...], y, preferred_element_type=jnp.float32)  # (R, D)

    # Output projection + bias, then residual with merged-head V (kept in f32).
    y = jnp.dot(y.astype(jnp.bfloat16), wproj_ref[...],
                preferred_element_type=jnp.float32) + bproj_ref[...]
    o_ref[...] = (v2 + y).astype(o_ref.dtype)


@lru_cache(maxsize=None)
def _fused_constants(block_b, num_heads, n_tokens, head_dim, in_dim):
    """Host-built, shape-cached replication / mask constants (grid-invariant)."""
    F = block_b * num_heads * n_tokens
    R = block_b * n_tokens
    fb = np.arange(F) // (num_heads * n_tokens)       # batch of fused row
    fh = (np.arange(F) // n_tokens) % num_heads       # head of fused row
    fn = np.arange(F) % n_tokens                      # query token of fused row
    rb = np.arange(R) // n_tokens                     # batch of slab row
    rn = np.arange(R) % n_tokens                      # token of slab row
    rep = ((fb[:, None] == rb[None, :]) & (fn[:, None] == rn[None, :]))
    hmask = fh[:, None] == (np.arange(in_dim) // head_dim)[None, :]
    negmask = np.where(fb[:, None] == rb[None, :], 0.0, -1e30)
    return (jnp.asarray(rep, jnp.bfloat16),
            jnp.asarray(rep.T, jnp.bfloat16),
            jnp.asarray(hmask, jnp.bfloat16),
            jnp.asarray(negmask, jnp.float32))


def attention(x, w_qkv, w_proj, b_proj, num_heads, *, block_b=None):
    """sr_ratio == 1 forward of `Attention`.

    x:      (B, N, C)
    w_qkv:  (C, 3*in_dim)     qkv.weight transposed (qkv_bias=False)
    w_proj: (in_dim, in_dim)  proj.weight transposed
    b_proj: (1, in_dim)       proj.bias
    """
    B, N, C = x.shape
    in_dim = w_qkv.shape[1] // 3
    head_dim = in_dim // num_heads
    scale = head_dim ** (-0.5)
    out_dtype = x.dtype

    if block_b is None:
        # >= 2 "parallel" grid steps so v7x's second TensorCore gets half the
        # batch; on single-TC v5e/v6e the extra step costs ~0.35 us.
        block_b = B // 2 if (B % 2 == 0 and B >= 2) else B
    assert B % block_b == 0, "block_b must divide B"

    # One-time weight prep (constant-folded under jit with constant weights):
    # split fused QKV into per-section weights, fold the attention scale into Wq,
    # cast all matmul operands to bf16 (accumulation stays f32 in the kernel).
    w_q = (w_qkv[:, :in_dim] * scale).astype(jnp.bfloat16)
    w_k = w_qkv[:, in_dim:2 * in_dim].astype(jnp.bfloat16)
    w_v = w_qkv[:, 2 * in_dim:].astype(jnp.bfloat16)
    w_p = w_proj.astype(jnp.bfloat16)
    b_p = b_proj.astype(jnp.float32).reshape(1, in_dim)

    rep, unrep, hmask, negmask = _fused_constants(block_b, num_heads, N,
                                                  head_dim, in_dim)

    R = block_b * N
    F = block_b * num_heads * N
    x2 = x.reshape(B * N, C).astype(jnp.bfloat16)    # batch fused into matmul M dim

    cross = block_b > 1
    inputs = [x2, w_q, w_k, w_v, w_p, b_p, rep, unrep, hmask]
    in_specs = [
        pl.BlockSpec((R, C), lambda i: (i, 0)),              # token slab tile
        pl.BlockSpec((C, in_dim), lambda i: (0, 0)),          # Wq (scale folded in)
        pl.BlockSpec((C, in_dim), lambda i: (0, 0)),          # Wk
        pl.BlockSpec((C, in_dim), lambda i: (0, 0)),          # Wv
        pl.BlockSpec((in_dim, in_dim), lambda i: (0, 0)),     # Wproj
        pl.BlockSpec((1, in_dim), lambda i: (0, 0)),          # bproj
        pl.BlockSpec((F, R), lambda i: (0, 0)),               # rep
        pl.BlockSpec((R, F), lambda i: (0, 0)),               # rep^T
        pl.BlockSpec((F, in_dim), lambda i: (0, 0)),          # head mask
    ]
    if cross:
        inputs.append(negmask)
        in_specs.append(pl.BlockSpec((F, R), lambda i: (0, 0)))

    out2 = pl.pallas_call(
        partial(attention_kernel, cross_batch_mask=cross),
        out_shape=jax.ShapeDtypeStruct((B * N, in_dim), out_dtype),
        grid=(B // block_b,),
        in_specs=in_specs,
        out_specs=pl.BlockSpec((R, in_dim), lambda i: (i, 0)),
        compiler_params=pltpu.CompilerParams(
            dimension_semantics=("parallel",)),
    )(*inputs)

    return out2.reshape(B, N, in_dim)


def attention_reference(x, w_qkv, w_proj, b_proj, num_heads):
    """Pure-JAX f32 reference mirroring the PyTorch forward (sr_ratio=1)."""
    B, N, C = x.shape
    in_dim = w_qkv.shape[1] // 3
    head_dim = in_dim // num_heads
    scale = head_dim ** (-0.5)

    qkv = x @ w_qkv                                               # (B, N, 3*in_dim)
    qkv = qkv.reshape(B, N, 3, num_heads, head_dim).transpose(2, 0, 3, 1, 4)
    q, k, v = qkv[0], qkv[1], qkv[2]                              # (B, H, N, hd)
    attn = jnp.einsum('bhqd,bhkd->bhqk', q, k) * scale
    attn = jax.nn.softmax(attn, axis=-1)
    y = jnp.einsum('bhqk,bhkd->bhqd', attn, v)
    y = y.transpose(0, 2, 1, 3).reshape(B, N, in_dim)
    y = y @ w_proj + b_proj
    v_res = v.transpose(0, 2, 1, 3).reshape(B, N, in_dim)
    return v_res + y


if __name__ == "__main__":
    # Small shapes consistent with the module: dim=C=32, in_dim=32, num_heads=8.
    B, N, dim = 2, 16, 32
    in_dim, num_heads = 32, 8

    key = jax.random.PRNGKey(0)
    kx, kw1, kw2, kb = jax.random.split(key, 4)

    x = jax.random.normal(kx, (B, N, dim), dtype=jnp.float32)
    # qkv: nn.Linear(dim, in_dim*3, bias=False) -> weight passed as (dim, 3*in_dim)
    w_qkv = jax.random.normal(kw1, (dim, 3 * in_dim), dtype=jnp.float32) * 0.05
    # proj: nn.Linear(in_dim, in_dim)           -> weight passed as (in_dim, in_dim)
    w_proj = jax.random.normal(kw2, (in_dim, in_dim), dtype=jnp.float32) * 0.05
    b_proj = jax.random.normal(kb, (1, in_dim), dtype=jnp.float32) * 0.05

    ref = attention_reference(x, w_qkv, w_proj, b_proj, num_heads)

    # Default path: block_b = B // 2 -> grid of 2 "parallel" steps.
    out = jax.block_until_ready(attention(x, w_qkv, w_proj, b_proj, num_heads))
    assert out.shape == (B, N, in_dim)
    # Tolerance covers bf16 matmul operands + approximate (EUP) softmax reciprocal.
    assert jnp.allclose(out, ref, atol=2e-2, rtol=2e-2), "mismatch vs reference"

    # Fully batch-fused path (grid of 1, cross-batch masking active).
    out_fused = jax.block_until_ready(
        attention(x, w_qkv, w_proj, b_proj, num_heads, block_b=B))
    assert jnp.allclose(out_fused, ref, atol=2e-2, rtol=2e-2), "mismatch (fused)"

    # TODO(synk): sr_ratio > 1 path (strided Conv2d spatial reduction + LayerNorm)
    # not implemented; the module default sr_ratio=1 is the path reproduced here.
    print("KERNEL_OK")
</pallas_src>

<mosaic_0001>
module attributes {stable_mosaic.version = 11 : i64} {
  func.func @attention_kernel(%arg0: i32, %arg1: memref<16x32xbf16, #tpu.memory_space<vmem>>, %arg2: memref<32x32xbf16, #tpu.memory_space<vmem>>, %arg3: memref<32x32xbf16, #tpu.memory_space<vmem>>, %arg4: memref<32x32xbf16, #tpu.memory_space<vmem>>, %arg5: memref<32x32xbf16, #tpu.memory_space<vmem>>, %arg6: memref<1x32xf32, #tpu.memory_space<vmem>>, %arg7: memref<128x16xbf16, #tpu.memory_space<vmem>>, %arg8: memref<16x128xbf16, #tpu.memory_space<vmem>>, %arg9: memref<128x32xbf16, #tpu.memory_space<vmem>>, %arg10: memref<16x32xf32, #tpu.memory_space<vmem>>) attributes {dimension_semantics = [#tpu.dimension_semantics<parallel>], iteration_bounds = array<i64: 2>, scalar_prefetch = 0 : i64, scratch_operands = 0 : i64, tpu.core_type = #tpu.core_type<tc>, window_params = [{transform_indices = @transform_0, window_bounds = array<i64: 16, 32>}, {pipeline_mode = #tpu.pipeline_mode<synchronous>, transform_indices = @transform_1, window_bounds = array<i64: 32, 32>}, {pipeline_mode = #tpu.pipeline_mode<synchronous>, transform_indices = @transform_2, window_bounds = array<i64: 32, 32>}, {pipeline_mode = #tpu.pipeline_mode<synchronous>, transform_indices = @transform_3, window_bounds = array<i64: 32, 32>}, {pipeline_mode = #tpu.pipeline_mode<synchronous>, transform_indices = @transform_4, window_bounds = array<i64: 32, 32>}, {pipeline_mode = #tpu.pipeline_mode<synchronous>, transform_indices = @transform_5, window_bounds = array<i64: 1, 32>}, {pipeline_mode = #tpu.pipeline_mode<synchronous>, transform_indices = @transform_6, window_bounds = array<i64: 128, 16>}, {pipeline_mode = #tpu.pipeline_mode<synchronous>, transform_indices = @transform_7, window_bounds = array<i64: 16, 128>}, {pipeline_mode = #tpu.pipeline_mode<synchronous>, transform_indices = @transform_8, window_bounds = array<i64: 128, 32>}, {transform_indices = @transform_9, window_bounds = array<i64: 16, 32>}]} {
    %c0 = arith.constant 0 : index
    %c0_0 = arith.constant 0 : index
    %0 = vector.load %arg1[%c0, %c0_0] : memref<16x32xbf16, #tpu.memory_space<vmem>>, vector<16x32xbf16>
    %c0_1 = arith.constant 0 : index
    %c0_2 = arith.constant 0 : index
    %1 = vector.load %arg2[%c0_1, %c0_2] : memref<32x32xbf16, #tpu.memory_space<vmem>>, vector<32x32xbf16>
    %cst = arith.constant dense<0.000000e+00> : vector<16x32xf32>
    %2 = tpu.matmul %0, %1, %cst {dimension_numbers = #tpu.dot_dimension_numbers<[1], [0], [0], [1], [0, 0, 1, 1], [], []>} : vector<16x32xbf16>, vector<32x32xbf16>, vector<16x32xf32> -> vector<16x32xf32>
    %c0_3 = arith.constant 0 : index
    %c0_4 = arith.constant 0 : index
    %3 = vector.load %arg3[%c0_3, %c0_4] : memref<32x32xbf16, #tpu.memory_space<vmem>>, vector<32x32xbf16>
    %cst_5 = arith.constant dense<0.000000e+00> : vector<16x32xf32>
    %4 = tpu.matmul %0, %3, %cst_5 {dimension_numbers = #tpu.dot_dimension_numbers<[1], [0], [0], [1], [0, 0, 1, 1], [], []>} : vector<16x32xbf16>, vector<32x32xbf16>, vector<16x32xf32> -> vector<16x32xf32>
    %c0_6 = arith.constant 0 : index
    %c0_7 = arith.constant 0 : index
    %5 = vector.load %arg4[%c0_6, %c0_7] : memref<32x32xbf16, #tpu.memory_space<vmem>>, vector<32x32xbf16>
    %cst_8 = arith.constant dense<0.000000e+00> : vector<16x32xf32>
    %6 = tpu.matmul %0, %5, %cst_8 {dimension_numbers = #tpu.dot_dimension_numbers<[1], [0], [0], [1], [0, 0, 1, 1], [], []>} : vector<16x32xbf16>, vector<32x32xbf16>, vector<16x32xf32> -> vector<16x32xf32>
    %7 = arith.truncf %4 : vector<16x32xf32> to vector<16x32xbf16>
    %8 = arith.truncf %6 : vector<16x32xf32> to vector<16x32xbf16>
    %c0_9 = arith.constant 0 : index
    %c0_10 = arith.constant 0 : index
    %9 = vector.load %arg7[%c0_9, %c0_10] : memref<128x16xbf16, #tpu.memory_space<vmem>>, vector<128x16xbf16>
    %c0_11 = arith.constant 0 : index
    %c0_12 = arith.constant 0 : index
    %10 = vector.load %arg9[%c0_11, %c0_12] : memref<128x32xbf16, #tpu.memory_space<vmem>>, vector<128x32xbf16>
    %11 = arith.truncf %2 : vector<16x32xf32> to vector<16x32xbf16>
    %cst_13 = arith.constant dense<0.000000e+00> : vector<128x32xf32>
    %12 = tpu.matmul %9, %11, %cst_13 {dimension_numbers = #tpu.dot_dimension_numbers<[1], [0], [0], [1], [0, 0, 1, 1], [], []>} : vector<128x16xbf16>, vector<16x32xbf16>, vector<128x32xf32> -> vector<128x32xf32>
    %13 = arith.truncf %12 : vector<128x32xf32> to vector<128x32xbf16>
    %14 = arith.mulf %13, %10 : vector<128x32xbf16>
    %cst_14 = arith.constant dense<0.000000e+00> : vector<128x16xf32>
    %15 = tpu.matmul %14, %7, %cst_14 {dimension_numbers = #tpu.dot_dimension_numbers<[1], [1], [0], [0], [0, 0, 1, 0], [], []>} : vector<128x32xbf16>, vector<16x32xbf16>, vector<128x16xf32> -> vector<128x16xf32>
    %cst_15 = arith.constant dense<0xFF800000> : vector<128xf32>
    %16 = vector.multi_reduction <maximumf>, %15, %cst_15 [1] : vector<128x16xf32> to vector<128xf32>
    %17 = vector.shape_cast %16 : vector<128xf32> to vector<128x1xf32>
    %18 = vector.broadcast %17 : vector<128x1xf32> to vector<128x16xf32>
    %19 = arith.subf %15, %18 : vector<128x16xf32>
    %20 = math.exp %19 : vector<128x16xf32>
    %cst_16 = arith.constant dense<0.000000e+00> : vector<128xf32>
    %21 = vector.multi_reduction <add>, %20, %cst_16 [1] : vector<128x16xf32> to vector<128xf32>
    %22 = vector.shape_cast %21 : vector<128xf32> to vector<128x1xf32>
    %23 = tpu.reciprocal %22 {approx = true} : vector<128x1xf32> -> vector<128x1xf32>
    %24 = vector.broadcast %23 : vector<128x1xf32> to vector<128x16xf32>
    %25 = arith.mulf %20, %24 : vector<128x16xf32>
    %26 = arith.truncf %25 : vector<128x16xf32> to vector<128x16xbf16>
    %cst_17 = arith.constant dense<0.000000e+00> : vector<128x32xf32>
    %27 = tpu.matmul %26, %8, %cst_17 {dimension_numbers = #tpu.dot_dimension_numbers<[1], [0], [0], [1], [0, 0, 1, 1], [], []>} : vector<128x16xbf16>, vector<16x32xbf16>, vector<128x32xf32> -> vector<128x32xf32>
    %28 = arith.truncf %27 : vector<128x32xf32> to vector<128x32xbf16>
    %29 = arith.mulf %28, %10 : vector<128x32xbf16>
    %c0_18 = arith.constant 0 : index
    %c0_19 = arith.constant 0 : index
    %30 = vector.load %arg8[%c0_18, %c0_19] : memref<16x128xbf16, #tpu.memory_space<vmem>>, vector<16x128xbf16>
    %cst_20 = arith.constant dense<0.000000e+00> : vector<16x32xf32>
    %31 = tpu.matmul %30, %29, %cst_20 {dimension_numbers = #tpu.dot_dimension_numbers<[1], [0], [0], [1], [0, 0, 1, 1], [], []>} : vector<16x128xbf16>, vector<128x32xbf16>, vector<16x32xf32> -> vector<16x32xf32>
    %32 = arith.truncf %31 : vector<16x32xf32> to vector<16x32xbf16>
    %c0_21 = arith.constant 0 : index
    %c0_22 = arith.constant 0 : index
    %33 = vector.load %arg5[%c0_21, %c0_22] : memref<32x32xbf16, #tpu.memory_space<vmem>>, vector<32x32xbf16>
    %cst_23 = arith.constant dense<0.000000e+00> : vector<16x32xf32>
    %34 = tpu.matmul %32, %33, %cst_23 {dimension_numbers = #tpu.dot_dimension_numbers<[1], [0], [0], [1], [0, 0, 1, 1], [], []>} : vector<16x32xbf16>, vector<32x32xbf16>, vector<16x32xf32> -> vector<16x32xf32>
    %c0_24 = arith.constant 0 : index
    %c0_25 = arith.constant 0 : index
    %35 = vector.load %arg6[%c0_24, %c0_25] : memref<1x32xf32, #tpu.memory_space<vmem>>, vector<1x32xf32>
    %36 = vector.broadcast %35 : vector<1x32xf32> to vector<16x32xf32>
    %37 = arith.addf %34, %36 : vector<16x32xf32>
    %38 = arith.addf %6, %37 : vector<16x32xf32>
    %c0_26 = arith.constant 0 : index
    %c0_27 = arith.constant 0 : index
    %39 = vector.load %arg10[%c0_26, %c0_27] : memref<16x32xf32, #tpu.memory_space<vmem>>, vector<16x32xf32>
    tpu.vector_store %arg10[%c0_26, %c0_27], %38 {strides = array<i32>} : memref<16x32xf32, #tpu.memory_space<vmem>>, vector<16x32xf32>,
    return
  }
  func.func @transform_0(%arg0: i32) -> (i32, i32) {
    %c0_i32 = arith.constant 0 : i32
    %c0_i32_0 = arith.constant 0 : i32
    return %arg0, %c0_i32 : i32, i32
  }
  func.func @transform_1(%arg0: i32) -> (i32, i32) {
    %c0_i32 = arith.constant 0 : i32
    %c0_i32_0 = arith.constant 0 : i32
    %c0_i32_1 = arith.constant 0 : i32
    return %c0_i32, %c0_i32_0 : i32, i32
  }
  func.func @transform_2(%arg0: i32) -> (i32, i32) {
    %c0_i32 = arith.constant 0 : i32
    %c0_i32_0 = arith.constant 0 : i32
    %c0_i32_1 = arith.constant 0 : i32
    return %c0_i32, %c0_i32_0 : i32, i32
  }
  func.func @transform_3(%arg0: i32) -> (i32, i32) {
    %c0_i32 = arith.constant 0 : i32
    %c0_i32_0 = arith.constant 0 : i32
    %c0_i32_1 = arith.constant 0 : i32
    return %c0_i32, %c0_i32_0 : i32, i32
  }
  func.func @transform_4(%arg0: i32) -> (i32, i32) {
    %c0_i32 = arith.constant 0 : i32
    %c0_i32_0 = arith.constant 0 : i32
    %c0_i32_1 = arith.constant 0 : i32
    return %c0_i32, %c0_i32_0 : i32, i32
  }
  func.func @transform_5(%arg0: i32) -> (i32, i32) {
    %c0_i32 = arith.constant 0 : i32
    %c0_i32_0 = arith.constant 0 : i32
    %c0_i32_1 = arith.constant 0 : i32
    return %c0_i32, %c0_i32_0 : i32, i32
  }
  func.func @transform_6(%arg0: i32) -> (i32, i32) {
    %c0_i32 = arith.constant 0 : i32
    %c0_i32_0 = arith.constant 0 : i32
    %c0_i32_1 = arith.constant 0 : i32
    return %c0_i32, %c0_i32_0 : i32, i32
  }
  func.func @transform_7(%arg0: i32) -> (i32, i32) {
    %c0_i32 = arith.constant 0 : i32
    %c0_i32_0 = arith.constant 0 : i32
    %c0_i32_1 = arith.constant 0 : i32
    return %c0_i32, %c0_i32_0 : i32, i32
  }
  func.func @transform_8(%arg0: i32) -> (i32, i32) {
    %c0_i32 = arith.constant 0 : i32
    %c0_i32_0 = arith.constant 0 : i32
    %c0_i32_1 = arith.constant 0 : i32
    return %c0_i32, %c0_i32_0 : i32, i32
  }
  func.func @transform_9(%arg0: i32) -> (i32, i32) {
    %c0_i32 = arith.constant 0 : i32
    %c0_i32_0 = arith.constant 0 : i32
    return %arg0, %c0_i32 : i32, i32
  }
}

</mosaic_0001>

<llo_original>
// kernel: tpu_custom_call.1
$region0: #{tpu_custom_call.1}
  #allocation0 [shape = 'u32[]', space=smem, size = 0x4, offset = 0x4, fixed_abs, tag = 'smem constant byte address 0x4 - core index']
  #allocation1 [shape = 'u32[144,128]{1,0:T(1,128)}', space=vmem, size = 0x12000, scoped, tag = 'internal scratch']
  %s0 = inlined_call_operand.vmem [shape: bf16[32,32], index: 0, kind: input, shape index: {}]
  %s1 = inlined_call_operand.vmem [shape: bf16[32,32], index: 1, kind: input, shape index: {}]
  %s2 = inlined_call_operand.vmem [shape: bf16[32,32], index: 2, kind: input, shape index: {}]
  %s3 = inlined_call_operand.vmem [shape: bf16[32,32], index: 3, kind: input, shape index: {}]
  %s4 = inlined_call_operand.vmem [shape: bf16[32,32], index: 4, kind: input, shape index: {}]
  %s5 = inlined_call_operand.vmem [shape: f32[1,32], index: 5, kind: input, shape index: {}]
  %s6 = inlined_call_operand.vmem [shape: bf16[128,16], index: 6, kind: input, shape index: {}]
  %s7 = inlined_call_operand.vmem [shape: bf16[16,128], index: 7, kind: input, shape index: {}]
  %s8 = inlined_call_operand.vmem [shape: bf16[128,32], index: 8, kind: input, shape index: {}]
  %s9 = inlined_call_operand.hbm [shape: f32[32,32], index: 9, kind: output, shape index: {}]
  %s10 = sld [smem:[#allocation0]]
  $region69: #{tpu_custom_call.1} parent=0
    _
  %s12 = ssub.s32 1, %s10
  %s13 = scalar_select 0, %s12, %s10
  $region1: #{tpu_custom_call.1} parent=0
    #allocation2 [shape = 'u8[16384]{0}', space=vmem, size = 0x4000, scoped, tag = 'output window, operand 0']
    #allocation3 [shape = 's32[2]{0}', space=sflag, size = 0x8, scoped, tag = 'scoped memory for tpu_custom_call.1']
    %14 = vsyncpa [#allocation3], 0
    %s15 = scalar_lea.sflag [#allocation3], 1
    %16 = vsyncpa %s15, 0
    loop: start=0, step=1, limit=4
    $region2: #{tpu_custom_call.1} parent=1 // loop_pre_header
      _
    $region3: #{tpu_custom_call.1} parent=1 // loop_header
      %s18 = sphi 0, %s22
      %p19 = scmp.ge.s32.totalorder %s18, 4
      %s28 = sphi 0, %s30
      %s31 = sphi 0, %s28
      %s32 = sphi 0, %s31
      %s48 = sphi 0, %s32
      %s52 = sphi 0, %s52
      %s54 = sphi 0, %s52
      %s55 = sphi 0, %s54
      %s69 = sphi 0, %s55
      %s73 = sphi 0, %s73
      %s75 = sphi 0, %s73
      %s76 = sphi 0, %s75
      %s90 = sphi 0, %s76
      %s94 = sphi 0, %s94
      %s96 = sphi 0, %s94
      %s97 = sphi 0, %s96
      %s111 = sphi 0, %s97
      %s115 = sphi 0, %s115
      %s117 = sphi 0, %s115
      %s118 = sphi 0, %s117
      %s132 = sphi 0, %s118
      %s136 = sphi 0, %s136
      %s138 = sphi 0, %s136
      %s139 = sphi 0, %s138
      %s153 = sphi 0, %s139
      %s157 = sphi 0, %s157
      %s159 = sphi 0, %s157
      %s160 = sphi 0, %s159
      %s174 = sphi 0, %s160
      %s178 = sphi 0, %s178
      %s180 = sphi 0, %s178
      %s181 = sphi 0, %s180
      %s195 = sphi 0, %s181
      %s199 = sphi 0, %s199
      %s201 = sphi 0, %s199
      %s202 = sphi 0, %s201
      %s216 = sphi 0, %s202
      %s222 = sphi 0, %s224
      %s225 = sphi 0, %s222
      %s226 = sphi 0, %s225
      %s242 = sphi 0, %s226
    $region4: #{tpu_custom_call.1} parent=1 // loop_header_branch
      %21 = sbr.rel (%p19) target = $region8
    $region5: #{tpu_custom_call.1} parent=1 // loop_body
      %s23 = ssub.s32 %s18, 1
      %s24 = ssub.s32 %s18, 2
      %s25 = sadd.s32 %s18, 1
      %s26 = ssub.s32 %s18, %s25
      %p27 = scmp.eq.s32.totalorder %s26, 0
      %s29 = sadd.s32 %s28, 1
      %s30 = scalar_select %p27, %s28, %s29
      %p33 = pneg %p27
      %p34 = scmp.eq.s32.totalorder %s18, 1
      %p35 = por %p33, %p34
      %p36 = scmp.ne.s32.totalorder %s28, %s31
      %p37 = scmp.eq.s32.totalorder %s18, 0
      %p38 = por %p36, %p37
      %p39 = scmp.ne.s32.totalorder %s28, %s31
      %p40 = scmp.eq.s32.totalorder %s23, 1
      %p41 = por %p39, %p40
      %p42 = scmp.ne.s32.totalorder %s31, %s32
      %p43 = scmp.eq.s32.totalorder %s23, 0
      %p44 = por %p42, %p43
      %p45 = scmp.ne.s32.totalorder %s31, %s32
      %p46 = scmp.eq.s32.totalorder %s24, 1
      %p47 = por %p45, %p46
      %p49 = scmp.ne.s32.totalorder %s32, %s48
      %p50 = scmp.eq.s32.totalorder %s24, 0
      %p51 = por %p49, %p50
      %s53 = sadd.s32 %s52, 1
      %p56 = scmp.eq.s32.totalorder %s18, 1
      %p57 = scmp.ne.s32.totalorder %s52, %s54
      %p58 = scmp.eq.s32.totalorder %s18, 0
      %p59 = por %p57, %p58
      %p60 = scmp.ne.s32.totalorder %s52, %s54
      %p61 = scmp.eq.s32.totalorder %s23, 1
      %p62 = por %p60, %p61
      %p63 = scmp.ne.s32.totalorder %s54, %s55
      %p64 = scmp.eq.s32.totalorder %s23, 0
      %p65 = por %p63, %p64
      %p66 = scmp.ne.s32.totalorder %s54, %s55
      %p67 = scmp.eq.s32.totalorder %s24, 1
      %p68 = por %p66, %p67
      %p70 = scmp.ne.s32.totalorder %s55, %s69
      %p71 = scmp.eq.s32.totalorder %s24, 0
      %p72 = por %p70, %p71
      %s74 = sadd.s32 %s73, 1
      %p77 = scmp.eq.s32.totalorder %s18, 1
      %p78 = scmp.ne.s32.totalorder %s73, %s75
      %p79 = scmp.eq.s32.totalorder %s18, 0
      %p80 = por %p78, %p79
      %p81 = scmp.ne.s32.totalorder %s73, %s75
      %p82 = scmp.eq.s32.totalorder %s23, 1
      %p83 = por %p81, %p82
      %p84 = scmp.ne.s32.totalorder %s75, %s76
      %p85 = scmp.eq.s32.totalorder %s23, 0
      %p86 = por %p84, %p85
      %p87 = scmp.ne.s32.totalorder %s75, %s76
      %p88 = scmp.eq.s32.totalorder %s24, 1
      %p89 = por %p87, %p88
      %p91 = scmp.ne.s32.totalorder %s76, %s90
      %p92 = scmp.eq.s32.totalorder %s24, 0
      %p93 = por %p91, %p92
      %s95 = sadd.s32 %s94, 1
      %p98 = scmp.eq.s32.totalorder %s18, 1
      %p99 = scmp.ne.s32.totalorder %s94, %s96
      %p100 = scmp.eq.s32.totalorder %s18, 0
      %p101 = por %p99, %p100
      %p102 = scmp.ne.s32.totalorder %s94, %s96
      %p103 = scmp.eq.s32.totalorder %s23, 1
      %p104 = por %p102, %p103
      %p105 = scmp.ne.s32.totalorder %s96, %s97
      %p106 = scmp.eq.s32.totalorder %s23, 0
      %p107 = por %p105, %p106
      %p108 = scmp.ne.s32.totalorder %s96, %s97
      %p109 = scmp.eq.s32.totalorder %s24, 1
      %p110 = por %p108, %p109
      %p112 = scmp.ne.s32.totalorder %s97, %s111
      %p113 = scmp.eq.s32.totalorder %s24, 0
      %p114 = por %p112, %p113
      %s116 = sadd.s32 %s115, 1
      %p119 = scmp.eq.s32.totalorder %s18, 1
      %p120 = scmp.ne.s32.totalorder %s115, %s117
      %p121 = scmp.eq.s32.totalorder %s18, 0
      %p122 = por %p120, %p121
      %p123 = scmp.ne.s32.totalorder %s115, %s117
      %p124 = scmp.eq.s32.totalorder %s23, 1
      %p125 = por %p123, %p124
      %p126 = scmp.ne.s32.totalorder %s117, %s118
      %p127 = scmp.eq.s32.totalorder %s23, 0
      %p128 = por %p126, %p127
      %p129 = scmp.ne.s32.totalorder %s117, %s118
      %p130 = scmp.eq.s32.totalorder %s24, 1
      %p131 = por %p129, %p130
      %p133 = scmp.ne.s32.totalorder %s118, %s132
      %p134 = scmp.eq.s32.totalorder %s24, 0
      %p135 = por %p133, %p134
      %s137 = sadd.s32 %s136, 1
      %p140 = scmp.eq.s32.totalorder %s18, 1
      %p141 = scmp.ne.s32.totalorder %s136, %s138
      %p142 = scmp.eq.s32.totalorder %s18, 0
      %p143 = por %p141, %p142
      %p144 = scmp.ne.s32.totalorder %s136, %s138
      %p145 = scmp.eq.s32.totalorder %s23, 1
      %p146 = por %p144, %p145
      %p147 = scmp.ne.s32.totalorder %s138, %s139
      %p148 = scmp.eq.s32.totalorder %s23, 0
      %p149 = por %p147, %p148
      %p150 = scmp.ne.s32.totalorder %s138, %s139
      %p151 = scmp.eq.s32.totalorder %s24, 1
      %p152 = por %p150, %p151
      %p154 = scmp.ne.s32.totalorder %s139, %s153
      %p155 = scmp.eq.s32.totalorder %s24, 0
      %p156 = por %p154, %p155
      %s158 = sadd.s32 %s157, 1
      %p161 = scmp.eq.s32.totalorder %s18, 1
      %p162 = scmp.ne.s32.totalorder %s157, %s159
      %p163 = scmp.eq.s32.totalorder %s18, 0
      %p164 = por %p162, %p163
      %p165 = scmp.ne.s32.totalorder %s157, %s159
      %p166 = scmp.eq.s32.totalorder %s23, 1
      %p167 = por %p165, %p166
      %p168 = scmp.ne.s32.totalorder %s159, %s160
      %p169 = scmp.eq.s32.totalorder %s23, 0
      %p170 = por %p168, %p169
      %p171 = scmp.ne.s32.totalorder %s159, %s160
      %p172 = scmp.eq.s32.totalorder %s24, 1
      %p173 = por %p171, %p172
      %p175 = scmp.ne.s32.totalorder %s160, %s174
      %p176 = scmp.eq.s32.totalorder %s24, 0
      %p177 = por %p175, %p176
      %s179 = sadd.s32 %s178, 1
      %p182 = scmp.eq.s32.totalorder %s18, 1
      %p183 = scmp.ne.s32.totalorder %s178, %s180
      %p184 = scmp.eq.s32.totalorder %s18, 0
      %p185 = por %p183, %p184
      %p186 = scmp.ne.s32.totalorder %s178, %s180
      %p187 = scmp.eq.s32.totalorder %s23, 1
      %p188 = por %p186, %p187
      %p189 = scmp.ne.s32.totalorder %s180, %s181
      %p190 = scmp.eq.s32.totalorder %s23, 0
      %p191 = por %p189, %p190
      %p192 = scmp.ne.s32.totalorder %s180, %s181
      %p193 = scmp.eq.s32.totalorder %s24, 1
      %p194 = por %p192, %p193
      %p196 = scmp.ne.s32.totalorder %s181, %s195
      %p197 = scmp.eq.s32.totalorder %s24, 0
      %p198 = por %p196, %p197
      %s200 = sadd.s32 %s199, 1
      %p203 = scmp.eq.s32.totalorder %s18, 1
      %p204 = scmp.ne.s32.totalorder %s199, %s201
      %p205 = scmp.eq.s32.totalorder %s18, 0
      %p206 = por %p204, %p205
      %p207 = scmp.ne.s32.totalorder %s199, %s201
      %p208 = scmp.eq.s32.totalorder %s23, 1
      %p209 = por %p207, %p208
      %p210 = scmp.ne.s32.totalorder %s201, %s202
      %p211 = scmp.eq.s32.totalorder %s23, 0
      %p212 = por %p210, %p211
      %p213 = scmp.ne.s32.totalorder %s201, %s202
      %p214 = scmp.eq.s32.totalorder %s24, 1
      %p215 = por %p213, %p214
      %p217 = scmp.ne.s32.totalorder %s202, %s216
      %p218 = scmp.eq.s32.totalorder %s24, 0
      %p219 = por %p217, %p218
      %s220 = ssub.s32 %s18, %s25
      %p221 = scmp.eq.s32.totalorder %s220, 0
      %s223 = sadd.s32 %s222, 1
      %s224 = scalar_select %p221, %s222, %s223
      %p227 = pneg %p221
      %p228 = scmp.eq.s32.totalorder %s18, 1
      %p229 = por %p227, %p228
      %p230 = scmp.ne.s32.totalorder %s222, %s225
      %p231 = scmp.eq.s32.totalorder %s18, 0
      %p232 = por %p230, %p231
      %p233 = scmp.ne.s32.totalorder %s222, %s225
      %p234 = scmp.eq.s32.totalorder %s23, 1
      %p235 = por %p233, %p234
      %p236 = scmp.ne.s32.totalorder %s225, %s226
      %p237 = scmp.eq.s32.totalorder %s23, 0
      %p238 = por %p236, %p237
      %p239 = scmp.ne.s32.totalorder %s225, %s226
      %p240 = scmp.eq.s32.totalorder %s24, 1
      %p241 = por %p239, %p240
      %p243 = scmp.ne.s32.totalorder %s226, %s242
      %p244 = scmp.eq.s32.totalorder %s24, 0
      %p245 = por %p243, %p244
      %p246 = scmp.le.s32.totalorder 1, %s18
      %p247 = scmp.lt.s32.totalorder %s18, 3
      %p248 = pnand %p246, %p247
      %p249 = pneg %p248
      // Predicated region
      $region9: #{tpu_custom_call.1} parent=5 // pred_check
        _
      $region10: #{tpu_custom_call.1} parent=5 // pred_check_branch
        %251 = sbr.rel (%p248) target = $region12
      $region11: #{tpu_custom_call.1} parent=5 // pred_region
        %s252 = ssub.s32 %s18, 1
        // Predicated region
        $region13: #{tpu_custom_call.1} parent=11 // pred_check
          %p253 = pneg %p65
        $region14: #{tpu_custom_call.1} parent=11 // pred_check_branch
          %255 = sbr.rel (%p253) target = $region16
        $region15: #{tpu_custom_call.1} parent=11 // pred_region
          _
        $region16: #{tpu_custom_call.1} parent=11 // pred_fallthru
          _
        // Predicated region
        $region17: #{tpu_custom_call.1} parent=11 // pred_check
          %p256 = pneg %p86
        $region18: #{tpu_custom_call.1} parent=11 // pred_check_branch
          %258 = sbr.rel (%p256) target = $region20
        $region19: #{tpu_custom_call.1} parent=11 // pred_region
          _
        $region20: #{tpu_custom_call.1} parent=11 // pred_fallthru
          _
        // Predicated region
        $region21: #{tpu_custom_call.1} parent=11 // pred_check
          %p259 = pneg %p107
        $region22: #{tpu_custom_call.1} parent=11 // pred_check_branch
          %261 = sbr.rel (%p259) target = $region24
        $region23: #{tpu_custom_call.1} parent=11 // pred_region
          _
        $region24: #{tpu_custom_call.1} parent=11 // pred_fallthru
          _
        // Predicated region
        $region25: #{tpu_custom_call.1} parent=11 // pred_check
          %p262 = pneg %p128
        $region26: #{tpu_custom_call.1} parent=11 // pred_check_branch
          %264 = sbr.rel (%p262) target = $region28
        $region27: #{tpu_custom_call.1} parent=11 // pred_region
          _
        $region28: #{tpu_custom_call.1} parent=11 // pred_fallthru
          _
        // Predicated region
        $region29: #{tpu_custom_call.1} parent=11 // pred_check
          %p265 = pneg %p149
        $region30: #{tpu_custom_call.1} parent=11 // pred_check_branch
          %267 = sbr.rel (%p265) target = $region32
        $region31: #{tpu_custom_call.1} parent=11 // pred_region
          _
        $region32: #{tpu_custom_call.1} parent=11 // pred_fallthru
          _
        // Predicated region
        $region33: #{tpu_custom_call.1} parent=11 // pred_check
          %p268 = pneg %p170
        $region34: #{tpu_custom_call.1} parent=11 // pred_check_branch
          %270 = sbr.rel (%p268) target = $region36
        $region35: #{tpu_custom_call.1} parent=11 // pred_region
          _
        $region36: #{tpu_custom_call.1} parent=11 // pred_fallthru
          _
        // Predicated region
        $region37: #{tpu_custom_call.1} parent=11 // pred_check
          %p271 = pneg %p191
        $region38: #{tpu_custom_call.1} parent=11 // pred_check_branch
          %273 = sbr.rel (%p271) target = $region40
        $region39: #{tpu_custom_call.1} parent=11 // pred_region
          _
        $region40: #{tpu_custom_call.1} parent=11 // pred_fallthru
          _
        // Predicated region
        $region41: #{tpu_custom_call.1} parent=11 // pred_check
          %p274 = pneg %p212
        $region42: #{tpu_custom_call.1} parent=11 // pred_check_branch
          %276 = sbr.rel (%p274) target = $region44
        $region43: #{tpu_custom_call.1} parent=11 // pred_region
          _
        $region44: #{tpu_custom_call.1} parent=11 // pred_fallthru
          _
      $region12: #{tpu_custom_call.1} parent=5 // pred_fallthru
        _
      %p277 = scmp.lt.s32.totalorder %s18, 2
      // Predicated region
      $region45: #{tpu_custom_call.1} parent=5 // pred_check
        %p278 = pneg %p277
      $region46: #{tpu_custom_call.1} parent=5 // pred_check_branch
        %280 = sbr.rel (%p278) target = $region48
      $region47: #{tpu_custom_call.1} parent=5 // pred_region
        // Predicated region
        $region49: #{tpu_custom_call.1} parent=47 // pred_check
          %p281 = pneg %p38
        $region50: #{tpu_custom_call.1} parent=47 // pred_check_branch
          %283 = sbr.rel (%p281) target = $region52
        $region51: #{tpu_custom_call.1} parent=47 // pred_region
          %s284 = smul.u32 2, %s18
          %p285 = scmp.lt.s32.totalorder %s284, 3
          %s286 = scalar_select %p285, %s284, 3
          %s287 = smul.addr %s286, 4
          %s288 = scalar_lea.vmem %s0, %s287
          %s289 = smul.u32 2, %s18
        $region52: #{tpu_custom_call.1} parent=47 // pred_fallthru
          _
      $region48: #{tpu_custom_call.1} parent=5 // pred_fallthru
        _
      %p290 = scmp.le.s32.totalorder 1, %s18
      %p291 = scmp.lt.s32.totalorder %s18, 3
      %p292 = pnand %p290, %p291
      %p293 = pneg %p292
      // Predicated region
      $region53: #{tpu_custom_call.1} parent=5 // pred_check
        _
      $region54: #{tpu_custom_call.1} parent=5 // pred_check_branch
        %295 = sbr.rel (%p292) target = $region56
      $region55: #{tpu_custom_call.1} parent=5 // pred_region
        %s296 = ssub.s32 %s18, 1
        %s297 = smul.u32 2, %s23
        %p298 = scmp.lt.s32.totalorder %s297, 3
        %s299 = scalar_select %p298, %s297, 3
        %s300 = smul.addr %s299, 4
        %s301 = scalar_lea.vmem %s0, %s300
        %p302 = pneg %p44
        %p303 = pneg %p41
        %p304 = pneg %p65
        %p305 = pneg %p62
        %p306 = pneg %p86
        %p307 = pneg %p83
        %p308 = pneg %p107
        %p309 = pneg %p104
        %p310 = pneg %p128
        %p311 = pneg %p125
        %p312 = pneg %p149
        %p313 = pneg %p146
        %p314 = pneg %p170
        %p315 = pneg %p167
        %p316 = pneg %p191
        %p317 = pneg %p188
        %p318 = pneg %p212
        %p319 = pneg %p209
        %p320 = pneg %p238
        %p321 = pneg %p235
        %s322 = sand.u32 %s225, 1
        %s323 = scalar_lea.sflag [#allocation3], %s322
        %s324 = sand.u32 %s225, 1
        %s325 = smul.addr %s324, 16
        %s326 = scalar_lea.vmem [#allocation2], %s325
        %s327 = smul.u32 2, %s23
        %p328 = scmp.lt.s32.totalorder %s327, 3
        %s329 = scalar_select %p328, %s327, 3
        %s330 = smul.addr %s329, 4
        %s331 = scalar_lea.vmem %s0, %s330
        %s332 = smul.u32 2, %s23
        %s333 = smul.u32 2, %s23
        %v335 = vld [vmem:[%s331] sm:$0xf]
        %v336 = vld [vmem:[%s331 + $0x4] sm:$0xf]
        %v337 = vld [vmem:[%s1] sm:$0xf]
        %v338 = vld [vmem:[%s1 + $0x4] sm:$0xf]
        %v339 = vld [vmem:[%s1 + $0x8] sm:$0xf]
        %v340 = vld [vmem:[%s1 + $0xc] sm:$0xf]
        %v343 = vunpack.c.l.b16 %v335
        %v344 = vunpack.c.l.b16 %v336
        %v345 = vpack.c.b16 %v344, %v343
        %v350 = vunpack.c.l.b16 %v337
        %v351 = vunpack.c.l.b16 %v338
        %v352 = vunpack.c.l.b16 %v339
        %v353 = vunpack.c.l.b16 %v340
        %v354 = vpack.c.b16 %v351, %v350
        %v355 = vpack.c.b16 %v353, %v352
        %vm358 = vcmask 261120
        %v360 = vsel %vm358, %v345, 0
        %362 = vmatprep.subr.bf16.mxu0 0
        %363 = vmatpush1.bf16.msra.mxu0 0
        %364 = vmatprep.subr.bf16.mxu0 0
        %365 = vmatpush1.bf16.msra.mxu0 0
        %366 = vmatprep.subr.bf16.mxu0 0
        %367 = vmatpush1.bf16.msra.mxu0 0
        %368 = vmatprep.subr.bf16.mxu0 0
        %369 = vmatpush1.bf16.msra.mxu0 0
        %370 = vmatprep.subr.bf16.mxu0 0
        %371 = vmatpush1.bf16.msra.mxu0 0
        %372 = vmatprep.subr.bf16.mxu0 0
        %373 = vmatpush1.bf16.msra.mxu0 0
        %374 = vmatprep.subr.bf16.mxu0 0
        %375 = vmatpush1.bf16.msra.mxu0 %v355
        %376 = vmatprep.subr.bf16.mxu0 0
        %377 = vmatpush1.bf16.msra.mxu0 %v354
        %378 = vmatprep.subr.bf16.mxu0 0
        %379 = vmatpush2.bf16.msra.mxu0 0
        %380 = vmatprep.subr.bf16.mxu0 0
        %381 = vmatpush2.bf16.msra.mxu0 0
        %382 = vmatprep.subr.bf16.mxu0 0
        %383 = vmatpush2.bf16.msra.mxu0 0
        %384 = vmatprep.subr.bf16.mxu0 0
        %385 = vmatpush2.bf16.msra.mxu0 0
        %386 = vmatprep.subr.bf16.mxu0 0
        %387 = vmatpush2.bf16.msra.mxu0 0
        %388 = vmatprep.subr.bf16.mxu0 0
        %389 = vmatpush2.bf16.msra.mxu0 0
        %390 = vmatprep.subr.bf16.mxu0 0
        %391 = vmatpush2.bf16.msra.mxu0 0
        %392 = vmatprep.subr.bf16.mxu0 0
        %393 = vmatpush2.bf16.msra.mxu0 0
        %394 = vmatprep.mubr.bf16.mxu0 0
        %395 = vmatmul.mubr.bf16.gmra.mxu0 %v360
        %v396 = vpop.f32.mrf.mxu0
        %v397 = vadd.f32 0.0, %v396
        %v398 = vpop.f32.mrf.mxu0
        %v399 = vpop.f32.mrf.mxu0
        %v400 = vadd.f32 0.0, %v399
        %v401 = vpop.f32.mrf.mxu0
        %402 = vdwg.mxu0
        %v403 = vld [vmem:[%s2] sm:$0xf]
        %v404 = vld [vmem:[%s2 + $0x4] sm:$0xf]
        %v405 = vld [vmem:[%s2 + $0x8] sm:$0xf]
        %v406 = vld [vmem:[%s2 + $0xc] sm:$0xf]
        %v411 = vunpack.c.l.b16 %v403
        %v412 = vunpack.c.l.b16 %v404
        %v413 = vunpack.c.l.b16 %v405
        %v414 = vunpack.c.l.b16 %v406
        %v415 = vpack.c.b16 %v412, %v411
        %v416 = vpack.c.b16 %v414, %v413
        %419 = vmatprep.subr.bf16.mxu0 0
        %420 = vmatpush1.bf16.msra.mxu0 0
        %421 = vmatprep.subr.bf16.mxu0 0
        %422 = vmatpush1.bf16.msra.mxu0 0
        %423 = vmatprep.subr.bf16.mxu0 0
        %424 = vmatpush1.bf16.msra.mxu0 0
        %425 = vmatprep.subr.bf16.mxu0 0
        %426 = vmatpush1.bf16.msra.mxu0 0
        %427 = vmatprep.subr.bf16.mxu0 0
        %428 = vmatpush1.bf16.msra.mxu0 0
        %429 = vmatprep.subr.bf16.mxu0 0
        %430 = vmatpush1.bf16.msra.mxu0 0
        %431 = vmatprep.subr.bf16.mxu0 0
        %432 = vmatpush1.bf16.msra.mxu0 %v416
        %433 = vmatprep.subr.bf16.mxu0 0
        %434 = vmatpush1.bf16.msra.mxu0 %v415
        %435 = vmatprep.subr.bf16.mxu0 0
        %436 = vmatpush2.bf16.msra.mxu0 0
        %437 = vmatprep.subr.bf16.mxu0 0
        %438 = vmatpush2.bf16.msra.mxu0 0
        %439 = vmatprep.subr.bf16.mxu0 0
        %440 = vmatpush2.bf16.msra.mxu0 0
        %441 = vmatprep.subr.bf16.mxu0 0
        %442 = vmatpush2.bf16.msra.mxu0 0
        %443 = vmatprep.subr.bf16.mxu0 0
        %444 = vmatpush2.bf16.msra.mxu0 0
        %445 = vmatprep.subr.bf16.mxu0 0
        %446 = vmatpush2.bf16.msra.mxu0 0
        %447 = vmatprep.subr.bf16.mxu0 0
        %448 = vmatpush2.bf16.msra.mxu0 0
        %449 = vmatprep.subr.bf16.mxu0 0
        %450 = vmatpush2.bf16.msra.mxu0 0
        %451 = vmatprep.mubr.bf16.mxu0 0
        %452 = vmatmul.mubr.bf16.gmra.mxu0 %v360
        %v453 = vpop.f32.mrf.mxu0
        %v454 = vadd.f32 0.0, %v453
        %v455 = vpop.f32.mrf.mxu0
        %v456 = vpop.f32.mrf.mxu0
        %v457 = vadd.f32 0.0, %v456
        %v458 = vpop.f32.mrf.mxu0
        %459 = vdwg.mxu0
        %v460 = vld [vmem:[%s3] sm:$0xf]
        %v461 = vld [vmem:[%s3 + $0x4] sm:$0xf]
        %v462 = vld [vmem:[%s3 + $0x8] sm:$0xf]
        %v463 = vld [vmem:[%s3 + $0xc] sm:$0xf]
        %v468 = vunpack.c.l.b16 %v460
        %v469 = vunpack.c.l.b16 %v461
        %v470 = vunpack.c.l.b16 %v462
        %v471 = vunpack.c.l.b16 %v463
        %v472 = vpack.c.b16 %v469, %v468
        %v473 = vpack.c.b16 %v471, %v470
        %476 = vmatprep.subr.bf16.mxu0 0
        %477 = vmatpush1.bf16.msra.mxu0 0
        %478 = vmatprep.subr.bf16.mxu0 0
        %479 = vmatpush1.bf16.msra.mxu0 0
        %480 = vmatprep.subr.bf16.mxu0 0
        %481 = vmatpush1.bf16.msra.mxu0 0
        %482 = vmatprep.subr.bf16.mxu0 0
        %483 = vmatpush1.bf16.msra.mxu0 0
        %484 = vmatprep.subr.bf16.mxu0 0
        %485 = vmatpush1.bf16.msra.mxu0 0
        %486 = vmatprep.subr.bf16.mxu0 0
        %487 = vmatpush1.bf16.msra.mxu0 0
        %488 = vmatprep.subr.bf16.mxu0 0
        %489 = vmatpush1.bf16.msra.mxu0 %v473
        %490 = vmatprep.subr.bf16.mxu0 0
        %491 = vmatpush1.bf16.msra.mxu0 %v472
        %492 = vmatprep.subr.bf16.mxu0 0
        %493 = vmatpush2.bf16.msra.mxu0 0
        %494 = vmatprep.subr.bf16.mxu0 0
        %495 = vmatpush2.bf16.msra.mxu0 0
        %496 = vmatprep.subr.bf16.mxu0 0
        %497 = vmatpush2.bf16.msra.mxu0 0
        %498 = vmatprep.subr.bf16.mxu0 0
        %499 = vmatpush2.bf16.msra.mxu0 0
        %500 = vmatprep.subr.bf16.mxu0 0
        %501 = vmatpush2.bf16.msra.mxu0 0
        %502 = vmatprep.subr.bf16.mxu0 0
        %503 = vmatpush2.bf16.msra.mxu0 0
        %504 = vmatprep.subr.bf16.mxu0 0
        %505 = vmatpush2.bf16.msra.mxu0 0
        %506 = vmatprep.subr.bf16.mxu0 0
        %507 = vmatpush2.bf16.msra.mxu0 0
        %508 = vmatprep.mubr.bf16.mxu0 0
        %509 = vmatmul.mubr.bf16.gmra.mxu0 %v360
        %v510 = vpop.f32.mrf.mxu0
        %v511 = vadd.f32 0.0, %v510
        %v512 = vpop.f32.mrf.mxu0
        %v513 = vpop.f32.mrf.mxu0
        %v514 = vadd.f32 0.0, %v513
        %v515 = vpop.f32.mrf.mxu0
        %516 = vdwg.mxu0
        %v517 = vpack.c.bf16 %v457, %v454
        %v518 = vpack.c.bf16 %v514, %v511
        %v519 = vld [vmem:[%s6] sm:$0xf]
        %v520 = vld [vmem:[%s6 + $0x4] sm:$0xf]
        %v521 = vld [vmem:[%s6 + $0x8] sm:$0xf]
        %v522 = vld [vmem:[%s6 + $0xc] sm:$0xf]
        %v523 = vld [vmem:[%s6 + $0x10] sm:$0xf]
        %v524 = vld [vmem:[%s6 + $0x14] sm:$0xf]
        %v525 = vld [vmem:[%s6 + $0x18] sm:$0xf]
        %v526 = vld [vmem:[%s6 + $0x1c] sm:$0xf]
        %v527 = vld [vmem:[%s6 + $0x20] sm:$0xf]
        %v528 = vld [vmem:[%s6 + $0x24] sm:$0xf]
        %v529 = vld [vmem:[%s6 + $0x28] sm:$0xf]
        %v530 = vld [vmem:[%s6 + $0x2c] sm:$0xf]
        %v531 = vld [vmem:[%s6 + $0x30] sm:$0xf]
        %v532 = vld [vmem:[%s6 + $0x34] sm:$0xf]
        %v533 = vld [vmem:[%s6 + $0x38] sm:$0xf]
        %v534 = vld [vmem:[%s6 + $0x3c] sm:$0xf]
        %v535 = vld [vmem:[%s8] sm:$0xf]
        %v536 = vld [vmem:[%s8 + $0x4] sm:$0xf]
        %v537 = vld [vmem:[%s8 + $0x8] sm:$0xf]
        %v538 = vld [vmem:[%s8 + $0xc] sm:$0xf]
        %v539 = vld [vmem:[%s8 + $0x10] sm:$0xf]
        %v540 = vld [vmem:[%s8 + $0x14] sm:$0xf]
        %v541 = vld [vmem:[%s8 + $0x18] sm:$0xf]
        %v542 = vld [vmem:[%s8 + $0x1c] sm:$0xf]
        %v543 = vld [vmem:[%s8 + $0x20] sm:$0xf]
        %v544 = vld [vmem:[%s8 + $0x24] sm:$0xf]
        %v545 = vld [vmem:[%s8 + $0x28] sm:$0xf]
        %v546 = vld [vmem:[%s8 + $0x2c] sm:$0xf]
        %v547 = vld [vmem:[%s8 + $0x30] sm:$0xf]
        %v548 = vld [vmem:[%s8 + $0x34] sm:$0xf]
        %v549 = vld [vmem:[%s8 + $0x38] sm:$0xf]
        %v550 = vld [vmem:[%s8 + $0x3c] sm:$0xf]
        %v551 = vpack.c.bf16 %v400, %v397
        %v568 = vunpack.c.l.b16 %v519
        %v569 = vunpack.c.l.b16 %v520
        %v570 = vunpack.c.l.b16 %v521
        %v571 = vunpack.c.l.b16 %v522
        %v572 = vunpack.c.l.b16 %v523
        %v573 = vunpack.c.l.b16 %v524
        %v574 = vunpack.c.l.b16 %v525
        %v575 = vunpack.c.l.b16 %v526
        %v576 = vunpack.c.l.b16 %v527
        %v577 = vunpack.c.l.b16 %v528
        %v578 = vunpack.c.l.b16 %v529
        %v579 = vunpack.c.l.b16 %v530
        %v580 = vunpack.c.l.b16 %v531
        %v581 = vunpack.c.l.b16 %v532
        %v582 = vunpack.c.l.b16 %v533
        %v583 = vunpack.c.l.b16 %v534
        %v584 = vpack.c.b16 %v569, %v568
        %v585 = vpack.c.b16 %v571, %v570
        %v586 = vpack.c.b16 %v573, %v572
        %v587 = vpack.c.b16 %v575, %v574
        %v588 = vpack.c.b16 %v577, %v576
        %v589 = vpack.c.b16 %v579, %v578
        %v590 = vpack.c.b16 %v581, %v580
        %v591 = vpack.c.b16 %v583, %v582
        %vm592 = vcmask 130048
        %v594 = vsel %vm592, %v584, 0
        %v597 = vsel %vm592, %v585, 0
        %v600 = vsel %vm592, %v586, 0
        %v603 = vsel %vm592, %v587, 0
        %v606 = vsel %vm592, %v588, 0
        %v609 = vsel %vm592, %v589, 0
        %v612 = vsel %vm592, %v590, 0
        %v615 = vsel %vm592, %v591, 0
        %617 = vmatprep.subr.bf16.mxu0 0
        %618 = vmatpush1.bf16.msra.mxu0 0
        %619 = vmatprep.subr.bf16.mxu0 0
        %620 = vmatpush1.bf16.msra.mxu0 0
        %621 = vmatprep.subr.bf16.mxu0 0
        %622 = vmatpush1.bf16.msra.mxu0 0
        %623 = vmatprep.subr.bf16.mxu0 0
        %624 = vmatpush1.bf16.msra.mxu0 0
        %625 = vmatprep.subr.bf16.mxu0 0
        %626 = vmatpush1.bf16.msra.mxu0 0
        %627 = vmatprep.subr.bf16.mxu0 0
        %628 = vmatpush1.bf16.msra.mxu0 0
        %629 = vmatprep.subr.bf16.mxu0 0
        %630 = vmatpush1.bf16.msra.mxu0 0
        %631 = vmatprep.subr.bf16.mxu0 0
        %632 = vmatpush1.bf16.msra.mxu0 %v551
        %633 = vmatprep.subr.bf16.mxu0 0
        %634 = vmatpush2.bf16.msra.mxu0 0
        %635 = vmatprep.subr.bf16.mxu0 0
        %636 = vmatpush2.bf16.msra.mxu0 0
        %637 = vmatprep.subr.bf16.mxu0 0
        %638 = vmatpush2.bf16.msra.mxu0 0
        %639 = vmatprep.subr.bf16.mxu0 0
        %640 = vmatpush2.bf16.msra.mxu0 0
        %641 = vmatprep.subr.bf16.mxu0 0
        %642 = vmatpush2.bf16.msra.mxu0 0
        %643 = vmatprep.subr.bf16.mxu0 0
        %644 = vmatpush2.bf16.msra.mxu0 0
        %645 = vmatprep.subr.bf16.mxu0 0
        %646 = vmatpush2.bf16.msra.mxu0 0
        %647 = vmatprep.subr.bf16.mxu0 0
        %648 = vmatpush2.bf16.msra.mxu0 0
        %649 = vmatprep.mubr.bf16.mxu0 0
        %650 = vmatmul.mubr.bf16.gmra.mxu0 %v594
        %v651 = vpop.f32.mrf.mxu0
        %v652 = vadd.f32 0.0, %v651
        %v653 = vpop.f32.mrf.mxu0
        %v654 = vpop.f32.mrf.mxu0
        %v655 = vadd.f32 0.0, %v654
        %v656 = vpop.f32.mrf.mxu0
        %657 = vmatprep.mubr.bf16.mxu0 0
        %658 = vmatmul.mubr.bf16.gmra.mxu0 %v597
        %v659 = vpop.f32.mrf.mxu0
        %v660 = vadd.f32 0.0, %v659
        %v661 = vpop.f32.mrf.mxu0
        %v662 = vpop.f32.mrf.mxu0
        %v663 = vadd.f32 0.0, %v662
        %v664 = vpop.f32.mrf.mxu0
        %665 = vmatprep.mubr.bf16.mxu0 0
        %666 = vmatmul.mubr.bf16.gmra.mxu0 %v600
        %v667 = vpop.f32.mrf.mxu0
        %v668 = vadd.f32 0.0, %v667
        %v669 = vpop.f32.mrf.mxu0
        %v670 = vpop.f32.mrf.mxu0
        %v671 = vadd.f32 0.0, %v670
        %v672 = vpop.f32.mrf.mxu0
        %673 = vmatprep.mubr.bf16.mxu0 0
        %674 = vmatmul.mubr.bf16.gmra.mxu0 %v603
        %v675 = vpop.f32.mrf.mxu0
        %v676 = vadd.f32 0.0, %v675
        %v677 = vpop.f32.mrf.mxu0
        %v678 = vpop.f32.mrf.mxu0
        %v679 = vadd.f32 0.0, %v678
        %v680 = vpop.f32.mrf.mxu0
        %681 = vmatprep.mubr.bf16.mxu0 0
        %682 = vmatmul.mubr.bf16.gmra.mxu0 %v606
        %v683 = vpop.f32.mrf.mxu0
        %v684 = vadd.f32 0.0, %v683
        %v685 = vpop.f32.mrf.mxu0
        %v686 = vpop.f32.mrf.mxu0
        %v687 = vadd.f32 0.0, %v686
        %v688 = vpop.f32.mrf.mxu0
        %689 = vmatprep.mubr.bf16.mxu0 0
        %690 = vmatmul.mubr.bf16.gmra.mxu0 %v609
        %v691 = vpop.f32.mrf.mxu0
        %v692 = vadd.f32 0.0, %v691
        %v693 = vpop.f32.mrf.mxu0
        %v694 = vpop.f32.mrf.mxu0
        %v695 = vadd.f32 0.0, %v694
        %v696 = vpop.f32.mrf.mxu0
        %697 = vmatprep.mubr.bf16.mxu0 0
        %698 = vmatmul.mubr.bf16.gmra.mxu0 %v612
        %v699 = vpop.f32.mrf.mxu0
        %v700 = vadd.f32 0.0, %v699
        %v701 = vpop.f32.mrf.mxu0
        %v702 = vpop.f32.mrf.mxu0
        %v703 = vadd.f32 0.0, %v702
        %v704 = vpop.f32.mrf.mxu0
        %705 = vmatprep.mubr.bf16.mxu0 0
        %706 = vmatmul.mubr.bf16.gmra.mxu0 %v615
        %v707 = vpop.f32.mrf.mxu0
        %v708 = vadd.f32 0.0, %v707
        %v709 = vpop.f32.mrf.mxu0
        %v710 = vpop.f32.mrf.mxu0
        %v711 = vadd.f32 0.0, %v710
        %v712 = vpop.f32.mrf.mxu0
        %713 = vdwg.mxu0
        %v714 = vpack.c.bf16 %v655, %v652
        %v715 = vpack.c.bf16 %v663, %v660
        %v716 = vpack.c.bf16 %v671, %v668
        %v717 = vpack.c.bf16 %v679, %v676
        %v718 = vpack.c.bf16 %v687, %v684
        %v719 = vpack.c.bf16 %v695, %v692
        %v720 = vpack.c.bf16 %v703, %v700
        %v721 = vpack.c.bf16 %v711, %v708
        %v738 = vunpack.c.l.b16 %v535
        %v739 = vunpack.c.l.b16 %v536
        %v740 = vunpack.c.l.b16 %v537
        %v741 = vunpack.c.l.b16 %v538
        %v742 = vunpack.c.l.b16 %v539
        %v743 = vunpack.c.l.b16 %v540
        %v744 = vunpack.c.l.b16 %v541
        %v745 = vunpack.c.l.b16 %v542
        %v746 = vunpack.c.l.b16 %v543
        %v747 = vunpack.c.l.b16 %v544
        %v748 = vunpack.c.l.b16 %v545
        %v749 = vunpack.c.l.b16 %v546
        %v750 = vunpack.c.l.b16 %v547
        %v751 = vunpack.c.l.b16 %v548
        %v752 = vunpack.c.l.b16 %v549
        %v753 = vunpack.c.l.b16 %v550
        %v754 = vpack.c.b16 %v739, %v738
        %v755 = vpack.c.b16 %v741, %v740
        %v756 = vpack.c.b16 %v743, %v742
        %v757 = vpack.c.b16 %v745, %v744
        %v758 = vpack.c.b16 %v747, %v746
        %v759 = vpack.c.b16 %v749, %v748
        %v760 = vpack.c.b16 %v751, %v750
        %v761 = vpack.c.b16 %v753, %v752
        %v770 = vmul.bf16 %v714, %v754
        %v771 = vmul.bf16 %v715, %v755
        %v772 = vmul.bf16 %v716, %v756
        %v773 = vmul.bf16 %v717, %v757
        %v774 = vmul.bf16 %v718, %v758
        %v775 = vmul.bf16 %v719, %v759
        %v776 = vmul.bf16 %v720, %v760
        %v777 = vmul.bf16 %v721, %v761
        %v779 = vsel %vm358, %v770, 0
        %v782 = vsel %vm358, %v771, 0
        %v785 = vsel %vm358, %v772, 0
        %v788 = vsel %vm358, %v773, 0
        %v791 = vsel %vm358, %v774, 0
        %v794 = vsel %vm358, %v775, 0
        %v797 = vsel %vm358, %v776, 0
        %v800 = vsel %vm358, %v777, 0
        %v803 = vsel %vm358, %v517, 0
        %805 = vmatprep.subr.bf16.mxu0 0
        %806 = vmatpush1.bf16.xpose.msra.mxu0 0
        %807 = vmatprep.subr.bf16.mxu0 0
        %808 = vmatpush1.bf16.xpose.msra.mxu0 0
        %809 = vmatprep.subr.bf16.mxu0 0
        %810 = vmatpush1.bf16.xpose.msra.mxu0 0
        %811 = vmatprep.subr.bf16.mxu0 0
        %812 = vmatpush1.bf16.xpose.msra.mxu0 0
        %813 = vmatprep.subr.bf16.mxu0 0
        %814 = vmatpush1.bf16.xpose.msra.mxu0 0
        %815 = vmatprep.subr.bf16.mxu0 0
        %816 = vmatpush1.bf16.xpose.msra.mxu0 0
        %817 = vmatprep.subr.bf16.mxu0 0
        %818 = vmatpush1.bf16.xpose.msra.mxu0 0
        %819 = vmatprep.subr.bf16.mxu0 0
        %820 = vmatpush1.bf16.xpose.msra.mxu0 %v803
        %821 = vmatprep.subr.bf16.mxu0 0
        %822 = vmatpush2.bf16.xpose.msra.mxu0 0
        %823 = vmatprep.subr.bf16.mxu0 0
        %824 = vmatpush2.bf16.xpose.msra.mxu0 0
        %825 = vmatprep.subr.bf16.mxu0 0
        %826 = vmatpush2.bf16.xpose.msra.mxu0 0
        %827 = vmatprep.subr.bf16.mxu0 0
        %828 = vmatpush2.bf16.xpose.msra.mxu0 0
        %829 = vmatprep.subr.bf16.mxu0 0
        %830 = vmatpush2.bf16.xpose.msra.mxu0 0
        %831 = vmatprep.subr.bf16.mxu0 0
        %832 = vmatpush2.bf16.xpose.msra.mxu0 0
        %833 = vmatprep.subr.bf16.mxu0 0
        %834 = vmatpush2.bf16.xpose.msra.mxu0 0
        %835 = vmatprep.subr.bf16.mxu0 0
        %836 = vmatpush2.bf16.xpose.msra.mxu0 0
        %837 = vmatprep.mubr.bf16.mxu0 0
        %838 = vmatmul.mubr.bf16.gmra.mxu0 %v779
        %v839 = vpop.f32.mrf.mxu0
        %v840 = vadd.f32 0.0, %v839
        %v841 = vpop.f32.mrf.mxu0
        %v842 = vpop.f32.mrf.mxu0
        %v843 = vadd.f32 0.0, %v842
        %v844 = vpop.f32.mrf.mxu0
        %845 = vmatprep.mubr.bf16.mxu0 0
        %846 = vmatmul.mubr.bf16.gmra.mxu0 %v782
        %v847 = vpop.f32.mrf.mxu0
        %v848 = vadd.f32 0.0, %v847
        %v849 = vpop.f32.mrf.mxu0
        %v850 = vpop.f32.mrf.mxu0
        %v851 = vadd.f32 0.0, %v850
        %v852 = vpop.f32.mrf.mxu0
        %853 = vmatprep.mubr.bf16.mxu0 0
        %854 = vmatmul.mubr.bf16.gmra.mxu0 %v785
        %v855 = vpop.f32.mrf.mxu0
        %v856 = vadd.f32 0.0, %v855
        %v857 = vpop.f32.mrf.mxu0
        %v858 = vpop.f32.mrf.mxu0
        %v859 = vadd.f32 0.0, %v858
        %v860 = vpop.f32.mrf.mxu0
        %861 = vmatprep.mubr.bf16.mxu0 0
        %862 = vmatmul.mubr.bf16.gmra.mxu0 %v788
        %v863 = vpop.f32.mrf.mxu0
        %v864 = vadd.f32 0.0, %v863
        %v865 = vpop.f32.mrf.mxu0
        %v866 = vpop.f32.mrf.mxu0
        %v867 = vadd.f32 0.0, %v866
        %v868 = vpop.f32.mrf.mxu0
        %869 = vmatprep.mubr.bf16.mxu0 0
        %870 = vmatmul.mubr.bf16.gmra.mxu0 %v791
        %v871 = vpop.f32.mrf.mxu0
        %v872 = vadd.f32 0.0, %v871
        %v873 = vpop.f32.mrf.mxu0
        %v874 = vpop.f32.mrf.mxu0
        %v875 = vadd.f32 0.0, %v874
        %v876 = vpop.f32.mrf.mxu0
        %877 = vmatprep.mubr.bf16.mxu0 0
        %878 = vmatmul.mubr.bf16.gmra.mxu0 %v794
        %v879 = vpop.f32.mrf.mxu0
        %v880 = vadd.f32 0.0, %v879
        %v881 = vpop.f32.mrf.mxu0
        %v882 = vpop.f32.mrf.mxu0
        %v883 = vadd.f32 0.0, %v882
        %v884 = vpop.f32.mrf.mxu0
        %885 = vmatprep.mubr.bf16.mxu0 0
        %886 = vmatmul.mubr.bf16.gmra.mxu0 %v797
        %v887 = vpop.f32.mrf.mxu0
        %v888 = vadd.f32 0.0, %v887
        %v889 = vpop.f32.mrf.mxu0
        %v890 = vpop.f32.mrf.mxu0
        %v891 = vadd.f32 0.0, %v890
        %v892 = vpop.f32.mrf.mxu0
        %893 = vmatprep.mubr.bf16.mxu0 0
        %894 = vmatmul.mubr.bf16.gmra.mxu0 %v800
        %v895 = vpop.f32.mrf.mxu0
        %v896 = vadd.f32 0.0, %v895
        %v897 = vpop.f32.mrf.mxu0
        %v898 = vpop.f32.mrf.mxu0
        %v899 = vadd.f32 0.0, %v898
        %v900 = vpop.f32.mrf.mxu0
        %901 = vdwg.mxu0
        %v902 = vsel %vm592, %v840, -inf
        %903 = vmax.xlane.f32.xlu0 %v902
        %v904 = vpop.xlane.xlu0 %903
        %v905 = vsel %vm592, %v843, -inf
        %906 = vmax.xlane.f32.xlu0 %v905
        %v907 = vpop.xlane.xlu0 %906
        %v908 = vsel %vm592, %v848, -inf
        %909 = vmax.xlane.f32.xlu0 %v908
        %v910 = vpop.xlane.xlu0 %909
        %v911 = vsel %vm592, %v851, -inf
        %912 = vmax.xlane.f32.xlu0 %v911
        %v913 = vpop.xlane.xlu0 %912
        %v914 = vsel %vm592, %v856, -inf
        %915 = vmax.xlane.f32.xlu0 %v914
        %v916 = vpop.xlane.xlu0 %915
        %v917 = vsel %vm592, %v859, -inf
        %918 = vmax.xlane.f32.xlu0 %v917
        %v919 = vpop.xlane.xlu0 %918
        %v920 = vsel %vm592, %v864, -inf
        %921 = vmax.xlane.f32.xlu0 %v920
        %v922 = vpop.xlane.xlu0 %921
        %v923 = vsel %vm592, %v867, -inf
        %924 = vmax.xlane.f32.xlu0 %v923
        %v925 = vpop.xlane.xlu0 %924
        %v926 = vsel %vm592, %v872, -inf
        %927 = vmax.xlane.f32.xlu0 %v926
        %v928 = vpop.xlane.xlu0 %927
        %v929 = vsel %vm592, %v875, -inf
        %930 = vmax.xlane.f32.xlu0 %v929
        %v931 = vpop.xlane.xlu0 %930
        %v932 = vsel %vm592, %v880, -inf
        %933 = vmax.xlane.f32.xlu0 %v932
        %v934 = vpop.xlane.xlu0 %933
        %v935 = vsel %vm592, %v883, -inf
        %936 = vmax.xlane.f32.xlu0 %v935
        %v937 = vpop.xlane.xlu0 %936
        %v938 = vsel %vm592, %v888, -inf
        %939 = vmax.xlane.f32.xlu0 %v938
        %v940 = vpop.xlane.xlu0 %939
        %v941 = vsel %vm592, %v891, -inf
        %942 = vmax.xlane.f32.xlu0 %v941
        %v943 = vpop.xlane.xlu0 %942
        %v944 = vsel %vm592, %v896, -inf
        %945 = vmax.xlane.f32.xlu0 %v944
        %v946 = vpop.xlane.xlu0 %945
        %v947 = vsel %vm592, %v899, -inf
        %948 = vmax.xlane.f32.xlu0 %v947
        %v949 = vpop.xlane.xlu0 %948
        %v950 = vsub.f32 %v840, %v904
        %v951 = vsub.f32 %v843, %v907
        %v952 = vsub.f32 %v848, %v910
        %v953 = vsub.f32 %v851, %v913
        %v954 = vsub.f32 %v856, %v916
        %v955 = vsub.f32 %v859, %v919
        %v956 = vsub.f32 %v864, %v922
        %v957 = vsub.f32 %v867, %v925
        %v958 = vsub.f32 %v872, %v928
        %v959 = vsub.f32 %v875, %v931
        %v960 = vsub.f32 %v880, %v934
        %v961 = vsub.f32 %v883, %v937
        %v962 = vsub.f32 %v888, %v940
        %v963 = vsub.f32 %v891, %v943
        %v964 = vsub.f32 %v896, %v946
        %v965 = vsub.f32 %v899, %v949
        %v966 = vmul.f32 %v950, 1.442695
        %v967 = vpow.pop %v966
        %v968 = vmul.f32 %v951, 1.442695
        %v969 = vpow.pop %v968
        %v970 = vmul.f32 %v952, 1.442695
        %v971 = vpow.pop %v970
        %v972 = vmul.f32 %v953, 1.442695
        %v973 = vpow.pop %v972
        %v974 = vmul.f32 %v954, 1.442695
        %v975 = vpow.pop %v974
        %v976 = vmul.f32 %v955, 1.442695
        %v977 = vpow.pop %v976
        %v978 = vmul.f32 %v956, 1.442695
        %v979 = vpow.pop %v978
        %v980 = vmul.f32 %v957, 1.442695
        %v981 = vpow.pop %v980
        %v982 = vmul.f32 %v958, 1.442695
        %v983 = vpow.pop %v982
        %v984 = vmul.f32 %v959, 1.442695
        %v985 = vpow.pop %v984
        %v986 = vmul.f32 %v960, 1.442695
        %v987 = vpow.pop %v986
        %v988 = vmul.f32 %v961, 1.442695
        %v989 = vpow.pop %v988
        %v990 = vmul.f32 %v962, 1.442695
        %v991 = vpow.pop %v990
        %v992 = vmul.f32 %v963, 1.442695
        %v993 = vpow.pop %v992
        %v994 = vmul.f32 %v964, 1.442695
        %v995 = vpow.pop %v994
        %v996 = vmul.f32 %v965, 1.442695
        %v997 = vpow.pop %v996
        %v998 = vsel %vm592, %v967, 0.0
        %999 = vadd.xlane.f32.xlu0 %v998
        %v1000 = vpop.xlane.xlu0 %999
        %v1001 = vsel %vm592, %v969, 0.0
        %1002 = vadd.xlane.f32.xlu0 %v1001
        %v1003 = vpop.xlane.xlu0 %1002
        %v1004 = vsel %vm592, %v971, 0.0
        %1005 = vadd.xlane.f32.xlu0 %v1004
        %v1006 = vpop.xlane.xlu0 %1005
        %v1007 = vsel %vm592, %v973, 0.0
        %1008 = vadd.xlane.f32.xlu0 %v1007
        %v1009 = vpop.xlane.xlu0 %1008
        %v1010 = vsel %vm592, %v975, 0.0
        %1011 = vadd.xlane.f32.xlu0 %v1010
        %v1012 = vpop.xlane.xlu0 %1011
        %v1013 = vsel %vm592, %v977, 0.0
        %1014 = vadd.xlane.f32.xlu0 %v1013
        %v1015 = vpop.xlane.xlu0 %1014
        %v1016 = vsel %vm592, %v979, 0.0
        %1017 = vadd.xlane.f32.xlu0 %v1016
        %v1018 = vpop.xlane.xlu0 %1017
        %v1019 = vsel %vm592, %v981, 0.0
        %1020 = vadd.xlane.f32.xlu0 %v1019
        %v1021 = vpop.xlane.xlu0 %1020
        %v1022 = vsel %vm592, %v983, 0.0
        %1023 = vadd.xlane.f32.xlu0 %v1022
        %v1024 = vpop.xlane.xlu0 %1023
        %v1025 = vsel %vm592, %v985, 0.0
        %1026 = vadd.xlane.f32.xlu0 %v1025
        %v1027 = vpop.xlane.xlu0 %1026
        %v1028 = vsel %vm592, %v987, 0.0
        %1029 = vadd.xlane.f32.xlu0 %v1028
        %v1030 = vpop.xlane.xlu0 %1029
        %v1031 = vsel %vm592, %v989, 0.0
        %1032 = vadd.xlane.f32.xlu0 %v1031
        %v1033 = vpop.xlane.xlu0 %1032
        %v1034 = vsel %vm592, %v991, 0.0
        %1035 = vadd.xlane.f32.xlu0 %v1034
        %v1036 = vpop.xlane.xlu0 %1035
        %v1037 = vsel %vm592, %v993, 0.0
        %1038 = vadd.xlane.f32.xlu0 %v1037
        %v1039 = vpop.xlane.xlu0 %1038
        %v1040 = vsel %vm592, %v995, 0.0
        %1041 = vadd.xlane.f32.xlu0 %v1040
        %v1042 = vpop.xlane.xlu0 %1041
        %v1043 = vsel %vm592, %v997, 0.0
        %1044 = vadd.xlane.f32.xlu0 %v1043
        %v1045 = vpop.xlane.xlu0 %1044
        %v1046 = vrcp.pop %v1000
        %v1047 = vrcp.pop %v1003
        %v1048 = vrcp.pop %v1006
        %v1049 = vrcp.pop %v1009
        %v1050 = vrcp.pop %v1012
        %v1051 = vrcp.pop %v1015
        %v1052 = vrcp.pop %v1018
        %v1053 = vrcp.pop %v1021
        %v1054 = vrcp.pop %v1024
        %v1055 = vrcp.pop %v1027
        %v1056 = vrcp.pop %v1030
        %v1057 = vrcp.pop %v1033
        %v1058 = vrcp.pop %v1036
        %v1059 = vrcp.pop %v1039
        %v1060 = vrcp.pop %v1042
        %v1061 = vrcp.pop %v1045
        %v1062 = vmul.f32 %v967, %v1046
        %v1063 = vmul.f32 %v969, %v1047
        %v1064 = vmul.f32 %v971, %v1048
        %v1065 = vmul.f32 %v973, %v1049
        %v1066 = vmul.f32 %v975, %v1050
        %v1067 = vmul.f32 %v977, %v1051
        %v1068 = vmul.f32 %v979, %v1052
        %v1069 = vmul.f32 %v981, %v1053
        %v1070 = vmul.f32 %v983, %v1054
        %v1071 = vmul.f32 %v985, %v1055
        %v1072 = vmul.f32 %v987, %v1056
        %v1073 = vmul.f32 %v989, %v1057
        %v1074 = vmul.f32 %v991, %v1058
        %v1075 = vmul.f32 %v993, %v1059
        %v1076 = vmul.f32 %v995, %v1060
        %v1077 = vmul.f32 %v997, %v1061
        %v1078 = vpack.c.bf16 %v1063, %v1062
        %v1079 = vpack.c.bf16 %v1065, %v1064
        %v1080 = vpack.c.bf16 %v1067, %v1066
        %v1081 = vpack.c.bf16 %v1069, %v1068
        %v1082 = vpack.c.bf16 %v1071, %v1070
        %v1083 = vpack.c.bf16 %v1073, %v1072
        %v1084 = vpack.c.bf16 %v1075, %v1074
        %v1085 = vpack.c.bf16 %v1077, %v1076
        %v1087 = vsel %vm592, %v1078, 0
        %v1090 = vsel %vm592, %v1079, 0
        %v1093 = vsel %vm592, %v1080, 0
        %v1096 = vsel %vm592, %v1081, 0
        %v1099 = vsel %vm592, %v1082, 0
        %v1102 = vsel %vm592, %v1083, 0
        %v1105 = vsel %vm592, %v1084, 0
        %v1108 = vsel %vm592, %v1085, 0
        %1110 = vmatprep.subr.bf16.mxu0 0
        %1111 = vmatpush1.bf16.msra.mxu0 0
        %1112 = vmatprep.subr.bf16.mxu0 0
        %1113 = vmatpush1.bf16.msra.mxu0 0
        %1114 = vmatprep.subr.bf16.mxu0 0
        %1115 = vmatpush1.bf16.msra.mxu0 0
        %1116 = vmatprep.subr.bf16.mxu0 0
        %1117 = vmatpush1.bf16.msra.mxu0 0
        %1118 = vmatprep.subr.bf16.mxu0 0
        %1119 = vmatpush1.bf16.msra.mxu0 0
        %1120 = vmatprep.subr.bf16.mxu0 0
        %1121 = vmatpush1.bf16.msra.mxu0 0
        %1122 = vmatprep.subr.bf16.mxu0 0
        %1123 = vmatpush1.bf16.msra.mxu0 0
        %1124 = vmatprep.subr.bf16.mxu0 0
        %1125 = vmatpush1.bf16.msra.mxu0 %v518
        %1126 = vmatprep.subr.bf16.mxu0 0
        %1127 = vmatpush2.bf16.msra.mxu0 0
        %1128 = vmatprep.subr.bf16.mxu0 0
        %1129 = vmatpush2.bf16.msra.mxu0 0
        %1130 = vmatprep.subr.bf16.mxu0 0
        %1131 = vmatpush2.bf16.msra.mxu0 0
        %1132 = vmatprep.subr.bf16.mxu0 0
        %1133 = vmatpush2.bf16.msra.mxu0 0
        %1134 = vmatprep.subr.bf16.mxu0 0
        %1135 = vmatpush2.bf16.msra.mxu0 0
        %1136 = vmatprep.subr.bf16.mxu0 0
        %1137 = vmatpush2.bf16.msra.mxu0 0
        %1138 = vmatprep.subr.bf16.mxu0 0
        %1139 = vmatpush2.bf16.msra.mxu0 0
        %1140 = vmatprep.subr.bf16.mxu0 0
        %1141 = vmatpush2.bf16.msra.mxu0 0
        %1142 = vmatprep.mubr.bf16.mxu0 0
        %1143 = vmatmul.mubr.bf16.gmra.mxu0 %v1087
        %v1144 = vpop.f32.mrf.mxu0
        %v1145 = vadd.f32 0.0, %v1144
        %v1146 = vpop.f32.mrf.mxu0
        %v1147 = vpop.f32.mrf.mxu0
        %v1148 = vadd.f32 0.0, %v1147
        %v1149 = vpop.f32.mrf.mxu0
        %1150 = vmatprep.mubr.bf16.mxu0 0
        %1151 = vmatmul.mubr.bf16.gmra.mxu0 %v1090
        %v1152 = vpop.f32.mrf.mxu0
        %v1153 = vadd.f32 0.0, %v1152
        %v1154 = vpop.f32.mrf.mxu0
        %v1155 = vpop.f32.mrf.mxu0
        %v1156 = vadd.f32 0.0, %v1155
        %v1157 = vpop.f32.mrf.mxu0
        %1158 = vmatprep.mubr.bf16.mxu0 0
        %1159 = vmatmul.mubr.bf16.gmra.mxu0 %v1093
        %v1160 = vpop.f32.mrf.mxu0
        %v1161 = vadd.f32 0.0, %v1160
        %v1162 = vpop.f32.mrf.mxu0
        %v1163 = vpop.f32.mrf.mxu0
        %v1164 = vadd.f32 0.0, %v1163
        %v1165 = vpop.f32.mrf.mxu0
        %1166 = vmatprep.mubr.bf16.mxu0 0
        %1167 = vmatmul.mubr.bf16.gmra.mxu0 %v1096
        %v1168 = vpop.f32.mrf.mxu0
        %v1169 = vadd.f32 0.0, %v1168
        %v1170 = vpop.f32.mrf.mxu0
        %v1171 = vpop.f32.mrf.mxu0
        %v1172 = vadd.f32 0.0, %v1171
        %v1173 = vpop.f32.mrf.mxu0
        %1174 = vmatprep.mubr.bf16.mxu0 0
        %1175 = vmatmul.mubr.bf16.gmra.mxu0 %v1099
        %v1176 = vpop.f32.mrf.mxu0
        %v1177 = vadd.f32 0.0, %v1176
        %v1178 = vpop.f32.mrf.mxu0
        %v1179 = vpop.f32.mrf.mxu0
        %v1180 = vadd.f32 0.0, %v1179
        %v1181 = vpop.f32.mrf.mxu0
        %1182 = vmatprep.mubr.bf16.mxu0 0
        %1183 = vmatmul.mubr.bf16.gmra.mxu0 %v1102
        %v1184 = vpop.f32.mrf.mxu0
        %v1185 = vadd.f32 0.0, %v1184
        %v1186 = vpop.f32.mrf.mxu0
        %v1187 = vpop.f32.mrf.mxu0
        %v1188 = vadd.f32 0.0, %v1187
        %v1189 = vpop.f32.mrf.mxu0
        %1190 = vmatprep.mubr.bf16.mxu0 0
        %1191 = vmatmul.mubr.bf16.gmra.mxu0 %v1105
        %v1192 = vpop.f32.mrf.mxu0
        %v1193 = vadd.f32 0.0, %v1192
        %v1194 = vpop.f32.mrf.mxu0
        %v1195 = vpop.f32.mrf.mxu0
        %v1196 = vadd.f32 0.0, %v1195
        %v1197 = vpop.f32.mrf.mxu0
        %1198 = vmatprep.mubr.bf16.mxu0 0
        %1199 = vmatmul.mubr.bf16.gmra.mxu0 %v1108
        %v1200 = vpop.f32.mrf.mxu0
        %v1201 = vadd.f32 0.0, %v1200
        %v1202 = vpop.f32.mrf.mxu0
        %v1203 = vpop.f32.mrf.mxu0
        %v1204 = vadd.f32 0.0, %v1203
        %v1205 = vpop.f32.mrf.mxu0
        %1206 = vdwg.mxu0
        %v1207 = vpack.c.bf16 %v1148, %v1145
        %v1208 = vpack.c.bf16 %v1156, %v1153
        %v1209 = vpack.c.bf16 %v1164, %v1161
        %v1210 = vpack.c.bf16 %v1172, %v1169
        %v1211 = vpack.c.bf16 %v1180, %v1177
        %v1212 = vpack.c.bf16 %v1188, %v1185
        %v1213 = vpack.c.bf16 %v1196, %v1193
        %v1214 = vpack.c.bf16 %v1204, %v1201
        %v1215 = vmul.bf16 %v1207, %v754
        %v1216 = vmul.bf16 %v1208, %v755
        %v1217 = vmul.bf16 %v1209, %v756
        %v1218 = vmul.bf16 %v1210, %v757
        %v1219 = vmul.bf16 %v1211, %v758
        %v1220 = vmul.bf16 %v1212, %v759
        %v1221 = vmul.bf16 %v1213, %v760
        %v1222 = vmul.bf16 %v1214, %v761
        %v1223 = vld [vmem:[%s7] sm:$0xf]
        %v1224 = vld [vmem:[%s7 + $0x4] sm:$0xf]
        %v1227 = vunpack.c.l.b16 %v1223
        %v1228 = vunpack.c.l.b16 %v1224
        %v1229 = vpack.c.b16 %v1228, %v1227
        %1231 = vmatprep.subr.bf16.mxu0 0
        %1232 = vmatpush1.bf16.msra.mxu0 %v1222
        %1233 = vmatprep.subr.bf16.mxu0 0
        %1234 = vmatpush1.bf16.msra.mxu0 %v1221
        %1235 = vmatprep.subr.bf16.mxu0 0
        %1236 = vmatpush1.bf16.msra.mxu0 %v1220
        %1237 = vmatprep.subr.bf16.mxu0 0
        %1238 = vmatpush1.bf16.msra.mxu0 %v1219
        %1239 = vmatprep.subr.bf16.mxu0 0
        %1240 = vmatpush1.bf16.msra.mxu0 %v1218
        %1241 = vmatprep.subr.bf16.mxu0 0
        %1242 = vmatpush1.bf16.msra.mxu0 %v1217
        %1243 = vmatprep.subr.bf16.mxu0 0
        %1244 = vmatpush1.bf16.msra.mxu0 %v1216
        %1245 = vmatprep.subr.bf16.mxu0 0
        %1246 = vmatpush1.bf16.msra.mxu0 %v1215
        %1247 = vmatprep.subr.bf16.mxu0 0
        %1248 = vmatpush2.bf16.msra.mxu0 0
        %1249 = vmatprep.subr.bf16.mxu0 0
        %1250 = vmatpush2.bf16.msra.mxu0 0
        %1251 = vmatprep.subr.bf16.mxu0 0
        %1252 = vmatpush2.bf16.msra.mxu0 0
        %1253 = vmatprep.subr.bf16.mxu0 0
        %1254 = vmatpush2.bf16.msra.mxu0 0
        %1255 = vmatprep.subr.bf16.mxu0 0
        %1256 = vmatpush2.bf16.msra.mxu0 0
        %1257 = vmatprep.subr.bf16.mxu0 0
        %1258 = vmatpush2.bf16.msra.mxu0 0
        %1259 = vmatprep.subr.bf16.mxu0 0
        %1260 = vmatpush2.bf16.msra.mxu0 0
        %1261 = vmatprep.subr.bf16.mxu0 0
        %1262 = vmatpush2.bf16.msra.mxu0 0
        %1263 = vmatprep.mubr.bf16.mxu0 0
        %1264 = vmatmul.mubr.bf16.gmra.mxu0 %v1229
        %v1265 = vpop.f32.mrf.mxu0
        %v1266 = vadd.f32 0.0, %v1265
        %v1267 = vpop.f32.mrf.mxu0
        %v1268 = vpop.f32.mrf.mxu0
        %v1269 = vadd.f32 0.0, %v1268
        %v1270 = vpop.f32.mrf.mxu0
        %1271 = vdwg.mxu0
        %v1272 = vpack.c.bf16 %v1269, %v1266
        %v1273 = vld [vmem:[%s4] sm:$0xf]
        %v1274 = vld [vmem:[%s4 + $0x4] sm:$0xf]
        %v1275 = vld [vmem:[%s4 + $0x8] sm:$0xf]
        %v1276 = vld [vmem:[%s4 + $0xc] sm:$0xf]
        %v1277 = vld [vmem:[%s5] sm:$0x1]
        %v1279 = vlaneseq
        %v1280 = vshrl.u32 %v1279, 7
        %v1281 = vsub.s32 0, %v1280
        %v1282 = vrot.slane %v1277, %v1281
        %v1288 = vunpack.c.l.b16 %v1273
        %v1289 = vunpack.c.l.b16 %v1274
        %v1290 = vunpack.c.l.b16 %v1275
        %v1291 = vunpack.c.l.b16 %v1276
        %v1292 = vpack.c.b16 %v1289, %v1288
        %v1293 = vpack.c.b16 %v1291, %v1290
        %v1297 = vsel %vm358, %v1272, 0
        %1299 = vmatprep.subr.bf16.mxu0 0
        %1300 = vmatpush1.bf16.msra.mxu0 0
        %1301 = vmatprep.subr.bf16.mxu0 0
        %1302 = vmatpush1.bf16.msra.mxu0 0
        %1303 = vmatprep.subr.bf16.mxu0 0
        %1304 = vmatpush1.bf16.msra.mxu0 0
        %1305 = vmatprep.subr.bf16.mxu0 0
        %1306 = vmatpush1.bf16.msra.mxu0 0
        %1307 = vmatprep.subr.bf16.mxu0 0
        %1308 = vmatpush1.bf16.msra.mxu0 0
        %1309 = vmatprep.subr.bf16.mxu0 0
        %1310 = vmatpush1.bf16.msra.mxu0 0
        %1311 = vmatprep.subr.bf16.mxu0 0
        %1312 = vmatpush1.bf16.msra.mxu0 %v1293
        %1313 = vmatprep.subr.bf16.mxu0 0
        %1314 = vmatpush1.bf16.msra.mxu0 %v1292
        %1315 = vmatprep.subr.bf16.mxu0 0
        %1316 = vmatpush2.bf16.msra.mxu0 0
        %1317 = vmatprep.subr.bf16.mxu0 0
        %1318 = vmatpush2.bf16.msra.mxu0 0
        %1319 = vmatprep.subr.bf16.mxu0 0
        %1320 = vmatpush2.bf16.msra.mxu0 0
        %1321 = vmatprep.subr.bf16.mxu0 0
        %1322 = vmatpush2.bf16.msra.mxu0 0
        %1323 = vmatprep.subr.bf16.mxu0 0
        %1324 = vmatpush2.bf16.msra.mxu0 0
        %1325 = vmatprep.subr.bf16.mxu0 0
        %1326 = vmatpush2.bf16.msra.mxu0 0
        %1327 = vmatprep.subr.bf16.mxu0 0
        %1328 = vmatpush2.bf16.msra.mxu0 0
        %1329 = vmatprep.subr.bf16.mxu0 0
        %1330 = vmatpush2.bf16.msra.mxu0 0
        %1331 = vmatprep.mubr.bf16.mxu0 0
        %1332 = vmatmul.mubr.bf16.gmra.mxu0 %v1297
        %v1333 = vpop.f32.mrf.mxu0
        %v1334 = vadd.f32 %v1282, %v1333
        %v1335 = vpop.f32.mrf.mxu0
        %v1336 = vpop.f32.mrf.mxu0
        %v1337 = vadd.f32 %v1282, %v1336
        %v1338 = vpop.f32.mrf.mxu0
        %1339 = vdwg.mxu0
        %v1340 = vadd.f32 %v511, %v1334
        %v1341 = vadd.f32 %v514, %v1337
        %1342 = vst.msk [vmem:[%s326] sm:$0xff] %vm358, %v1340
        %1343 = vst.msk [vmem:[%s326 + $0x8] sm:$0xff] %vm358, %v1341
        %s1344 = sand.u32 %s225, 1
        %s1345 = scalar_lea.sflag [#allocation3], %s1344
        %s1346 = sand.u32 %s225, 1
        %s1347 = smul.addr %s1346, 16
        %s1348 = scalar_lea.vmem [#allocation2], %s1347
        // Predicated region
        $region57: #{tpu_custom_call.1} parent=55 // pred_check
          %p1349 = pneg %p235
        $region58: #{tpu_custom_call.1} parent=55 // pred_check_branch
          %1351 = sbr.rel (%p1349) target = $region60
        $region59: #{tpu_custom_call.1} parent=55 // pred_region
          %s1352 = smul.u32 2, %s23
          %s1354 = ssub.s32 256, 256
          %1355 = vsyncadd %s1345, %s1354
          %s1356 = smul.addr %s1352, 128
          %s1357 = scalar_lea.hbm %s9, %s1356
          %s1358 = sshll.u32 %s1348, 4
          %s1359 = int_to_ptr.vmem [resolvable:$true] %s1358
          %1364 = dma.vmem_to_hbm [thread:$0]  %s1359, 256, %s1357, %s1345, 128, 128, 8
        $region60: #{tpu_custom_call.1} parent=55 // pred_fallthru
          _
      $region56: #{tpu_custom_call.1} parent=5 // pred_fallthru
        _
      %p1365 = scmp.le.s32.totalorder 2, %s18
      // Predicated region
      $region61: #{tpu_custom_call.1} parent=5 // pred_check
        %p1366 = pneg %p1365
      $region62: #{tpu_custom_call.1} parent=5 // pred_check_branch
        %1368 = sbr.rel (%p1366) target = $region64
      $region63: #{tpu_custom_call.1} parent=5 // pred_region
        %s1369 = ssub.s32 %s18, 2
        // Predicated region
        $region65: #{tpu_custom_call.1} parent=63 // pred_check
          %p1370 = pneg %p241
        $region66: #{tpu_custom_call.1} parent=63 // pred_check_branch
          %1372 = sbr.rel (%p1370) target = $region68
        $region67: #{tpu_custom_call.1} parent=63 // pred_region
          %s1373 = sand.u32 %s226, 1
          %s1374 = scalar_lea.sflag [#allocation3], %s1373
          %s1375 = sand.u32 %s226, 1
          %s1376 = smul.addr %s1375, 16
          %s1377 = scalar_lea.vmem [#allocation2], %s1376
          %1378 = dma.done %s1374, 256
        $region68: #{tpu_custom_call.1} parent=63 // pred_fallthru
          _
      $region64: #{tpu_custom_call.1} parent=5 // pred_fallthru
        _
    $region6: #{tpu_custom_call.1} parent=1 // loop_footer
      %s22 = sadd.s32 1, %s18
    $region7: #{tpu_custom_call.1} parent=1 // loop_footer_branch
      %17 = sbr.rel target = $region3
    $region8: #{tpu_custom_call.1} parent=1 // loop_exit
      _
    %1379 = vsyncpa [#allocation3], 1
    %s1380 = scalar_lea.sflag [#allocation3], 1
    %1381 = vsyncpa %s1380, 1

</llo_original>
